<compile_context>
chip_gen: v7x
topology: tpu7x:2x2x1
jax: 0.10.0
libtpu: 0.0.40
codegen_flags: <defaults>
</compile_context>

<pallas_src>
import jax
import jax.numpy as jnp
from jax.experimental import pallas as pl
from jax.experimental.pallas import tpu as pltpu


def _fused_conv_hardswish_kernel(w_ref, b_ref, x_ref, o_ref):
    # w_ref: (C*C,) f32 in SMEM, row-major [out, in] of the fused conv weight.
    # b_ref: (C,)   f32 in SMEM, fused bias.
    # x_ref / o_ref: (1, C, S, L) f32 VMEM blocks (pixels lane-dense on L).
    c = b_ref.shape[0]
    for co in range(c):
        # t3[co] = b[co] + sum_ci W[co, ci] * x[ci]  -- scalar-from-SMEM FMAs,
        # each x channel slab is read straight from the VMEM block (no
        # sublane/lane broadcast ops).
        acc = x_ref[0, 0] * w_ref[co * c]
        for ci in range(1, c):
            acc = acc + x_ref[0, ci] * w_ref[co * c + ci]
        t3 = acc + b_ref[co]
        # t2 = 3 + t3 ; t4 = clamp_min(t2, 0) ; t5 = clamp_max(t4, 6)
        t5 = jnp.minimum(jnp.maximum(t3 + 3.0, 0.0), 6.0)
        # t6 = t3 * t5 ; t7 = t6 / 6
        o_ref[0, co] = t3 * t5 * (1.0 / 6.0)


def model_forward(x_nchw, w1, b1, w2, b2):
    """x_nchw: (N, C, H, W) f32.  Returns (N, C, H, W, 1) like the torch model."""
    n, c, h, w = x_nchw.shape
    m = h * w

    # Fuse the two 1x1 convs (tiny (C,C) matmuls, done once in the wrapper):
    #   t3 = w2 @ (w1 @ x + b1) + b2 = (w2 @ w1) @ x + (w2 @ b1 + b2)
    w_f = jnp.dot(w2, w1)                  # (C_out, C_in)
    b_f = jnp.dot(w2, b1) + b2             # (C,)
    w_flat = w_f.reshape(c * c)

    # Choose a lane-dense pixel layout.  All reshapes below are metadata-only:
    # no transpose, no pad, no slice, no extra HBM passes.
    if m % 128 == 0:
        rows, cols = m // 128, 128         # each channel tile = dense (8,128) vregs
        s_blk = min(512, rows)             # <= ~1.3 MiB per block
        if n == 1 and rows >= 16:
            # keep >= 2 parallel grid blocks so both v7x TensorCores get work
            half = -(-rows // 2)
            half = -(-half // 8) * 8       # round up to a multiple of 8 sublanes
            s_blk = min(s_blk, half)
        col_blk = 128
    else:
        rows, cols = 1, m                  # single ragged pixel row
        s_blk = 1
        col_blk = m if m <= 65536 else 65536   # 65536 = 512 * 128 (lane aligned)
    x4 = x_nchw.reshape(n, c, rows, cols)

    grid = (n, pl.cdiv(rows, s_blk), pl.cdiv(cols, col_blk))

    xo_spec = pl.BlockSpec((1, c, s_blk, col_blk),
                           lambda ni, si, li: (ni, 0, si, li))
    smem_spec = pl.BlockSpec(memory_space=pltpu.MemorySpace.SMEM)

    out4 = pl.pallas_call(
        _fused_conv_hardswish_kernel,
        out_shape=jax.ShapeDtypeStruct((n, c, rows, cols), jnp.float32),
        grid=grid,
        in_specs=[smem_spec, smem_spec, xo_spec],
        out_specs=xo_spec,
        compiler_params=pltpu.CompilerParams(
            dimension_semantics=("parallel", "parallel", "parallel")),
    )(w_flat, b_f, x4)

    # (N, C, rows, cols) -> (N, C, H, W) -> unsqueeze(-1); metadata-only.
    return out4.reshape(n, c, h, w)[..., None]


def _reference(x, w1, b1, w2, b2):
    # Un-fused two-conv reference (matches the torch module exactly).
    t1 = jnp.einsum("nchw,oc->nohw", x, w1) + b1[None, :, None, None]
    t3 = jnp.einsum("nchw,oc->nohw", t1, w2) + b2[None, :, None, None]
    t5 = jnp.clip(t3 + 3.0, 0.0, 6.0)
    return ((t3 * t5) / 6.0)[..., None]


if __name__ == "__main__":
    key = jax.random.PRNGKey(0)
    k_x1, k_x2, k_w1, k_b1, k_w2, k_b2 = jax.random.split(key, 6)

    # Conv2d(5, 5, kernel_size=1) weights: (out_ch, in_ch, 1, 1) -> (out, in).
    C = 5
    bound = 1.0 / (C ** 0.5)
    w1 = jax.random.uniform(k_w1, (C, C), jnp.float32, -bound, bound)
    b1 = jax.random.uniform(k_b1, (C,), jnp.float32, -bound, bound)
    w2 = jax.random.uniform(k_w2, (C, C), jnp.float32, -bound, bound)
    b2 = jax.random.uniform(k_b2, (C,), jnp.float32, -bound, bound)

    # Case 1: spec shape (1, 5, 10, 10) -- single-block path, no pad / no slice.
    x1 = jax.random.normal(k_x1, (1, C, 10, 10), dtype=jnp.float32)
    out1 = model_forward(x1, w1, b1, w2, b2)
    jax.block_until_ready(out1)
    ref1 = _reference(x1, w1, b1, w2, b2)
    assert out1.shape == (1, C, 10, 10, 1)
    assert jnp.allclose(out1, ref1, atol=1e-4, rtol=1e-4)

    # Case 2: H*W multiple of 128 -- lane-dense (rows, 128) tiled path, grid over
    # batch (2 parallel blocks for megacore / v7x 2-TC sharding).
    x2 = jax.random.normal(k_x2, (2, C, 32, 32), dtype=jnp.float32)
    out2 = model_forward(x2, w1, b1, w2, b2)
    jax.block_until_ready(out2)
    ref2 = _reference(x2, w1, b1, w2, b2)
    assert out2.shape == (2, C, 32, 32, 1)
    assert jnp.allclose(out2, ref2, atol=1e-4, rtol=1e-4)

    print("KERNEL_OK")
</pallas_src>

<mosaic_0001>
module attributes {stable_mosaic.version = 11 : i64} {
  func.func @_fused_conv_hardswish_kernel(%arg0: i32, %arg1: i32, %arg2: i32, %arg3: memref<25xf32, #tpu.memory_space<smem>>, %arg4: memref<5xf32, #tpu.memory_space<smem>>, %arg5: memref<1x5x1x100xf32, #tpu.memory_space<vmem>>, %arg6: memref<1x5x1x100xf32, #tpu.memory_space<vmem>>) attributes {dimension_semantics = [#tpu.dimension_semantics<parallel>, #tpu.dimension_semantics<parallel>, #tpu.dimension_semantics<parallel>], iteration_bounds = array<i64: 1, 1, 1>, scalar_prefetch = 0 : i64, scratch_operands = 0 : i64, tpu.core_type = #tpu.core_type<tc>, window_params = [{transform_indices = @transform_0, window_bounds = array<i64: 25>}, {transform_indices = @transform_1, window_bounds = array<i64: 5>}, {transform_indices = @transform_2, window_bounds = array<i64: 1, 5, 1, 100>}, {transform_indices = @transform_3, window_bounds = array<i64: 1, 5, 1, 100>}]} {
    %c0 = arith.constant 0 : index
    %c0_0 = arith.constant 0 : index
    %c0_1 = arith.constant 0 : index
    %c0_2 = arith.constant 0 : index
    %0 = vector.load %arg5[%c0, %c0_0, %c0_1, %c0_2] : memref<1x5x1x100xf32, #tpu.memory_space<vmem>>, vector<1x1x1x100xf32>
    %1 = vector.shape_cast %0 : vector<1x1x1x100xf32> to vector<1x100xf32>
    %c0_3 = arith.constant 0 : index
    %2 = memref.load %arg3[%c0_3] : memref<25xf32, #tpu.memory_space<smem>>
    %3 = vector.broadcast %2 : f32 to vector<1x100xf32>
    %4 = arith.mulf %1, %3 : vector<1x100xf32>
    %c0_4 = arith.constant 0 : index
    %c1 = arith.constant 1 : index
    %c0_5 = arith.constant 0 : index
    %c0_6 = arith.constant 0 : index
    %5 = vector.load %arg5[%c0_4, %c1, %c0_5, %c0_6] : memref<1x5x1x100xf32, #tpu.memory_space<vmem>>, vector<1x1x1x100xf32>
    %6 = vector.shape_cast %5 : vector<1x1x1x100xf32> to vector<1x100xf32>
    %c1_7 = arith.constant 1 : index
    %7 = memref.load %arg3[%c1_7] : memref<25xf32, #tpu.memory_space<smem>>
    %8 = vector.broadcast %7 : f32 to vector<1x100xf32>
    %9 = arith.mulf %6, %8 : vector<1x100xf32>
    %10 = arith.addf %4, %9 : vector<1x100xf32>
    %c0_8 = arith.constant 0 : index
    %c2 = arith.constant 2 : index
    %c0_9 = arith.constant 0 : index
    %c0_10 = arith.constant 0 : index
    %11 = vector.load %arg5[%c0_8, %c2, %c0_9, %c0_10] : memref<1x5x1x100xf32, #tpu.memory_space<vmem>>, vector<1x1x1x100xf32>
    %12 = vector.shape_cast %11 : vector<1x1x1x100xf32> to vector<1x100xf32>
    %c2_11 = arith.constant 2 : index
    %13 = memref.load %arg3[%c2_11] : memref<25xf32, #tpu.memory_space<smem>>
    %14 = vector.broadcast %13 : f32 to vector<1x100xf32>
    %15 = arith.mulf %12, %14 : vector<1x100xf32>
    %16 = arith.addf %10, %15 : vector<1x100xf32>
    %c0_12 = arith.constant 0 : index
    %c3 = arith.constant 3 : index
    %c0_13 = arith.constant 0 : index
    %c0_14 = arith.constant 0 : index
    %17 = vector.load %arg5[%c0_12, %c3, %c0_13, %c0_14] : memref<1x5x1x100xf32, #tpu.memory_space<vmem>>, vector<1x1x1x100xf32>
    %18 = vector.shape_cast %17 : vector<1x1x1x100xf32> to vector<1x100xf32>
    %c3_15 = arith.constant 3 : index
    %19 = memref.load %arg3[%c3_15] : memref<25xf32, #tpu.memory_space<smem>>
    %20 = vector.broadcast %19 : f32 to vector<1x100xf32>
    %21 = arith.mulf %18, %20 : vector<1x100xf32>
    %22 = arith.addf %16, %21 : vector<1x100xf32>
    %c0_16 = arith.constant 0 : index
    %c4 = arith.constant 4 : index
    %c0_17 = arith.constant 0 : index
    %c0_18 = arith.constant 0 : index
    %23 = vector.load %arg5[%c0_16, %c4, %c0_17, %c0_18] : memref<1x5x1x100xf32, #tpu.memory_space<vmem>>, vector<1x1x1x100xf32>
    %24 = vector.shape_cast %23 : vector<1x1x1x100xf32> to vector<1x100xf32>
    %c4_19 = arith.constant 4 : index
    %25 = memref.load %arg3[%c4_19] : memref<25xf32, #tpu.memory_space<smem>>
    %26 = vector.broadcast %25 : f32 to vector<1x100xf32>
    %27 = arith.mulf %24, %26 : vector<1x100xf32>
    %28 = arith.addf %22, %27 : vector<1x100xf32>
    %c0_20 = arith.constant 0 : index
    %29 = memref.load %arg4[%c0_20] : memref<5xf32, #tpu.memory_space<smem>>
    %30 = vector.broadcast %29 : f32 to vector<1x100xf32>
    %31 = arith.addf %28, %30 : vector<1x100xf32>
    %cst = arith.constant 3.000000e+00 : f32
    %32 = vector.broadcast %cst : f32 to vector<1x100xf32>
    %33 = arith.addf %31, %32 : vector<1x100xf32>
    %cst_21 = arith.constant 0.000000e+00 : f32
    %34 = vector.broadcast %cst_21 : f32 to vector<1x100xf32>
    %35 = arith.maximumf %33, %34 : vector<1x100xf32>
    %cst_22 = arith.constant 6.000000e+00 : f32
    %36 = vector.broadcast %cst_22 : f32 to vector<1x100xf32>
    %37 = arith.minimumf %35, %36 : vector<1x100xf32>
    %38 = arith.mulf %31, %37 : vector<1x100xf32>
    %cst_23 = arith.constant 0.166666672 : f32
    %39 = vector.broadcast %cst_23 : f32 to vector<1x100xf32>
    %40 = arith.mulf %38, %39 : vector<1x100xf32>
    %c0_24 = arith.constant 0 : index
    %c0_25 = arith.constant 0 : index
    %c0_26 = arith.constant 0 : index
    %c0_27 = arith.constant 0 : index
    %41 = vector.load %arg6[%c0_24, %c0_25, %c0_26, %c0_27] : memref<1x5x1x100xf32, #tpu.memory_space<vmem>>, vector<1x1x1x100xf32>
    %42 = vector.shape_cast %41 : vector<1x1x1x100xf32> to vector<1x100xf32>
    %43 = vector.shape_cast %40 : vector<1x100xf32> to vector<1x1x1x100xf32>
    tpu.vector_store %arg6[%c0_24, %c0_25, %c0_26, %c0_27], %43 {strides = array<i32>} : memref<1x5x1x100xf32, #tpu.memory_space<vmem>>, vector<1x1x1x100xf32>,
    %c0_28 = arith.constant 0 : index
    %c0_29 = arith.constant 0 : index
    %c0_30 = arith.constant 0 : index
    %c0_31 = arith.constant 0 : index
    %44 = vector.load %arg5[%c0_28, %c0_29, %c0_30, %c0_31] : memref<1x5x1x100xf32, #tpu.memory_space<vmem>>, vector<1x1x1x100xf32>
    %45 = vector.shape_cast %44 : vector<1x1x1x100xf32> to vector<1x100xf32>
    %c5 = arith.constant 5 : index
    %46 = memref.load %arg3[%c5] : memref<25xf32, #tpu.memory_space<smem>>
    %47 = vector.broadcast %46 : f32 to vector<1x100xf32>
    %48 = arith.mulf %45, %47 : vector<1x100xf32>
    %c0_32 = arith.constant 0 : index
    %c1_33 = arith.constant 1 : index
    %c0_34 = arith.constant 0 : index
    %c0_35 = arith.constant 0 : index
    %49 = vector.load %arg5[%c0_32, %c1_33, %c0_34, %c0_35] : memref<1x5x1x100xf32, #tpu.memory_space<vmem>>, vector<1x1x1x100xf32>
    %50 = vector.shape_cast %49 : vector<1x1x1x100xf32> to vector<1x100xf32>
    %c6 = arith.constant 6 : index
    %51 = memref.load %arg3[%c6] : memref<25xf32, #tpu.memory_space<smem>>
    %52 = vector.broadcast %51 : f32 to vector<1x100xf32>
    %53 = arith.mulf %50, %52 : vector<1x100xf32>
    %54 = arith.addf %48, %53 : vector<1x100xf32>
    %c0_36 = arith.constant 0 : index
    %c2_37 = arith.constant 2 : index
    %c0_38 = arith.constant 0 : index
    %c0_39 = arith.constant 0 : index
    %55 = vector.load %arg5[%c0_36, %c2_37, %c0_38, %c0_39] : memref<1x5x1x100xf32, #tpu.memory_space<vmem>>, vector<1x1x1x100xf32>
    %56 = vector.shape_cast %55 : vector<1x1x1x100xf32> to vector<1x100xf32>
    %c7 = arith.constant 7 : index
    %57 = memref.load %arg3[%c7] : memref<25xf32, #tpu.memory_space<smem>>
    %58 = vector.broadcast %57 : f32 to vector<1x100xf32>
    %59 = arith.mulf %56, %58 : vector<1x100xf32>
    %60 = arith.addf %54, %59 : vector<1x100xf32>
    %c0_40 = arith.constant 0 : index
    %c3_41 = arith.constant 3 : index
    %c0_42 = arith.constant 0 : index
    %c0_43 = arith.constant 0 : index
    %61 = vector.load %arg5[%c0_40, %c3_41, %c0_42, %c0_43] : memref<1x5x1x100xf32, #tpu.memory_space<vmem>>, vector<1x1x1x100xf32>
    %62 = vector.shape_cast %61 : vector<1x1x1x100xf32> to vector<1x100xf32>
    %c8 = arith.constant 8 : index
    %63 = memref.load %arg3[%c8] : memref<25xf32, #tpu.memory_space<smem>>
    %64 = vector.broadcast %63 : f32 to vector<1x100xf32>
    %65 = arith.mulf %62, %64 : vector<1x100xf32>
    %66 = arith.addf %60, %65 : vector<1x100xf32>
    %c0_44 = arith.constant 0 : index
    %c4_45 = arith.constant 4 : index
    %c0_46 = arith.constant 0 : index
    %c0_47 = arith.constant 0 : index
    %67 = vector.load %arg5[%c0_44, %c4_45, %c0_46, %c0_47] : memref<1x5x1x100xf32, #tpu.memory_space<vmem>>, vector<1x1x1x100xf32>
    %68 = vector.shape_cast %67 : vector<1x1x1x100xf32> to vector<1x100xf32>
    %c9 = arith.constant 9 : index
    %69 = memref.load %arg3[%c9] : memref<25xf32, #tpu.memory_space<smem>>
    %70 = vector.broadcast %69 : f32 to vector<1x100xf32>
    %71 = arith.mulf %68, %70 : vector<1x100xf32>
    %72 = arith.addf %66, %71 : vector<1x100xf32>
    %c1_48 = arith.constant 1 : index
    %73 = memref.load %arg4[%c1_48] : memref<5xf32, #tpu.memory_space<smem>>
    %74 = vector.broadcast %73 : f32 to vector<1x100xf32>
    %75 = arith.addf %72, %74 : vector<1x100xf32>
    %cst_49 = arith.constant 3.000000e+00 : f32
    %76 = vector.broadcast %cst_49 : f32 to vector<1x100xf32>
    %77 = arith.addf %75, %76 : vector<1x100xf32>
    %cst_50 = arith.constant 0.000000e+00 : f32
    %78 = vector.broadcast %cst_50 : f32 to vector<1x100xf32>
    %79 = arith.maximumf %77, %78 : vector<1x100xf32>
    %cst_51 = arith.constant 6.000000e+00 : f32
    %80 = vector.broadcast %cst_51 : f32 to vector<1x100xf32>
    %81 = arith.minimumf %79, %80 : vector<1x100xf32>
    %82 = arith.mulf %75, %81 : vector<1x100xf32>
    %cst_52 = arith.constant 0.166666672 : f32
    %83 = vector.broadcast %cst_52 : f32 to vector<1x100xf32>
    %84 = arith.mulf %82, %83 : vector<1x100xf32>
    %c0_53 = arith.constant 0 : index
    %c1_54 = arith.constant 1 : index
    %c0_55 = arith.constant 0 : index
    %c0_56 = arith.constant 0 : index
    %85 = vector.load %arg6[%c0_53, %c1_54, %c0_55, %c0_56] : memref<1x5x1x100xf32, #tpu.memory_space<vmem>>, vector<1x1x1x100xf32>
    %86 = vector.shape_cast %85 : vector<1x1x1x100xf32> to vector<1x100xf32>
    %87 = vector.shape_cast %84 : vector<1x100xf32> to vector<1x1x1x100xf32>
    tpu.vector_store %arg6[%c0_53, %c1_54, %c0_55, %c0_56], %87 {strides = array<i32>} : memref<1x5x1x100xf32, #tpu.memory_space<vmem>>, vector<1x1x1x100xf32>,
    %c0_57 = arith.constant 0 : index
    %c0_58 = arith.constant 0 : index
    %c0_59 = arith.constant 0 : index
    %c0_60 = arith.constant 0 : index
    %88 = vector.load %arg5[%c0_57, %c0_58, %c0_59, %c0_60] : memref<1x5x1x100xf32, #tpu.memory_space<vmem>>, vector<1x1x1x100xf32>
    %89 = vector.shape_cast %88 : vector<1x1x1x100xf32> to vector<1x100xf32>
    %c10 = arith.constant 10 : index
    %90 = memref.load %arg3[%c10] : memref<25xf32, #tpu.memory_space<smem>>
    %91 = vector.broadcast %90 : f32 to vector<1x100xf32>
    %92 = arith.mulf %89, %91 : vector<1x100xf32>
    %c0_61 = arith.constant 0 : index
    %c1_62 = arith.constant 1 : index
    %c0_63 = arith.constant 0 : index
    %c0_64 = arith.constant 0 : index
    %93 = vector.load %arg5[%c0_61, %c1_62, %c0_63, %c0_64] : memref<1x5x1x100xf32, #tpu.memory_space<vmem>>, vector<1x1x1x100xf32>
    %94 = vector.shape_cast %93 : vector<1x1x1x100xf32> to vector<1x100xf32>
    %c11 = arith.constant 11 : index
    %95 = memref.load %arg3[%c11] : memref<25xf32, #tpu.memory_space<smem>>
    %96 = vector.broadcast %95 : f32 to vector<1x100xf32>
    %97 = arith.mulf %94, %96 : vector<1x100xf32>
    %98 = arith.addf %92, %97 : vector<1x100xf32>
    %c0_65 = arith.constant 0 : index
    %c2_66 = arith.constant 2 : index
    %c0_67 = arith.constant 0 : index
    %c0_68 = arith.constant 0 : index
    %99 = vector.load %arg5[%c0_65, %c2_66, %c0_67, %c0_68] : memref<1x5x1x100xf32, #tpu.memory_space<vmem>>, vector<1x1x1x100xf32>
    %100 = vector.shape_cast %99 : vector<1x1x1x100xf32> to vector<1x100xf32>
    %c12 = arith.constant 12 : index
    %101 = memref.load %arg3[%c12] : memref<25xf32, #tpu.memory_space<smem>>
    %102 = vector.broadcast %101 : f32 to vector<1x100xf32>
    %103 = arith.mulf %100, %102 : vector<1x100xf32>
    %104 = arith.addf %98, %103 : vector<1x100xf32>
    %c0_69 = arith.constant 0 : index
    %c3_70 = arith.constant 3 : index
    %c0_71 = arith.constant 0 : index
    %c0_72 = arith.constant 0 : index
    %105 = vector.load %arg5[%c0_69, %c3_70, %c0_71, %c0_72] : memref<1x5x1x100xf32, #tpu.memory_space<vmem>>, vector<1x1x1x100xf32>
    %106 = vector.shape_cast %105 : vector<1x1x1x100xf32> to vector<1x100xf32>
    %c13 = arith.constant 13 : index
    %107 = memref.load %arg3[%c13] : memref<25xf32, #tpu.memory_space<smem>>
    %108 = vector.broadcast %107 : f32 to vector<1x100xf32>
    %109 = arith.mulf %106, %108 : vector<1x100xf32>
    %110 = arith.addf %104, %109 : vector<1x100xf32>
    %c0_73 = arith.constant 0 : index
    %c4_74 = arith.constant 4 : index
    %c0_75 = arith.constant 0 : index
    %c0_76 = arith.constant 0 : index
    %111 = vector.load %arg5[%c0_73, %c4_74, %c0_75, %c0_76] : memref<1x5x1x100xf32, #tpu.memory_space<vmem>>, vector<1x1x1x100xf32>
    %112 = vector.shape_cast %111 : vector<1x1x1x100xf32> to vector<1x100xf32>
    %c14 = arith.constant 14 : index
    %113 = memref.load %arg3[%c14] : memref<25xf32, #tpu.memory_space<smem>>
    %114 = vector.broadcast %113 : f32 to vector<1x100xf32>
    %115 = arith.mulf %112, %114 : vector<1x100xf32>
    %116 = arith.addf %110, %115 : vector<1x100xf32>
    %c2_77 = arith.constant 2 : index
    %117 = memref.load %arg4[%c2_77] : memref<5xf32, #tpu.memory_space<smem>>
    %118 = vector.broadcast %117 : f32 to vector<1x100xf32>
    %119 = arith.addf %116, %118 : vector<1x100xf32>
    %cst_78 = arith.constant 3.000000e+00 : f32
    %120 = vector.broadcast %cst_78 : f32 to vector<1x100xf32>
    %121 = arith.addf %119, %120 : vector<1x100xf32>
    %cst_79 = arith.constant 0.000000e+00 : f32
    %122 = vector.broadcast %cst_79 : f32 to vector<1x100xf32>
    %123 = arith.maximumf %121, %122 : vector<1x100xf32>
    %cst_80 = arith.constant 6.000000e+00 : f32
    %124 = vector.broadcast %cst_80 : f32 to vector<1x100xf32>
    %125 = arith.minimumf %123, %124 : vector<1x100xf32>
    %126 = arith.mulf %119, %125 : vector<1x100xf32>
    %cst_81 = arith.constant 0.166666672 : f32
    %127 = vector.broadcast %cst_81 : f32 to vector<1x100xf32>
    %128 = arith.mulf %126, %127 : vector<1x100xf32>
    %c0_82 = arith.constant 0 : index
    %c2_83 = arith.constant 2 : index
    %c0_84 = arith.constant 0 : index
    %c0_85 = arith.constant 0 : index
    %129 = vector.load %arg6[%c0_82, %c2_83, %c0_84, %c0_85] : memref<1x5x1x100xf32, #tpu.memory_space<vmem>>, vector<1x1x1x100xf32>
    %130 = vector.shape_cast %129 : vector<1x1x1x100xf32> to vector<1x100xf32>
    %131 = vector.shape_cast %128 : vector<1x100xf32> to vector<1x1x1x100xf32>
    tpu.vector_store %arg6[%c0_82, %c2_83, %c0_84, %c0_85], %131 {strides = array<i32>} : memref<1x5x1x100xf32, #tpu.memory_space<vmem>>, vector<1x1x1x100xf32>,
    %c0_86 = arith.constant 0 : index
    %c0_87 = arith.constant 0 : index
    %c0_88 = arith.constant 0 : index
    %c0_89 = arith.constant 0 : index
    %132 = vector.load %arg5[%c0_86, %c0_87, %c0_88, %c0_89] : memref<1x5x1x100xf32, #tpu.memory_space<vmem>>, vector<1x1x1x100xf32>
    %133 = vector.shape_cast %132 : vector<1x1x1x100xf32> to vector<1x100xf32>
    %c15 = arith.constant 15 : index
    %134 = memref.load %arg3[%c15] : memref<25xf32, #tpu.memory_space<smem>>
    %135 = vector.broadcast %134 : f32 to vector<1x100xf32>
    %136 = arith.mulf %133, %135 : vector<1x100xf32>
    %c0_90 = arith.constant 0 : index
    %c1_91 = arith.constant 1 : index
    %c0_92 = arith.constant 0 : index
    %c0_93 = arith.constant 0 : index
    %137 = vector.load %arg5[%c0_90, %c1_91, %c0_92, %c0_93] : memref<1x5x1x100xf32, #tpu.memory_space<vmem>>, vector<1x1x1x100xf32>
    %138 = vector.shape_cast %137 : vector<1x1x1x100xf32> to vector<1x100xf32>
    %c16 = arith.constant 16 : index
    %139 = memref.load %arg3[%c16] : memref<25xf32, #tpu.memory_space<smem>>
    %140 = vector.broadcast %139 : f32 to vector<1x100xf32>
    %141 = arith.mulf %138, %140 : vector<1x100xf32>
    %142 = arith.addf %136, %141 : vector<1x100xf32>
    %c0_94 = arith.constant 0 : index
    %c2_95 = arith.constant 2 : index
    %c0_96 = arith.constant 0 : index
    %c0_97 = arith.constant 0 : index
    %143 = vector.load %arg5[%c0_94, %c2_95, %c0_96, %c0_97] : memref<1x5x1x100xf32, #tpu.memory_space<vmem>>, vector<1x1x1x100xf32>
    %144 = vector.shape_cast %143 : vector<1x1x1x100xf32> to vector<1x100xf32>
    %c17 = arith.constant 17 : index
    %145 = memref.load %arg3[%c17] : memref<25xf32, #tpu.memory_space<smem>>
    %146 = vector.broadcast %145 : f32 to vector<1x100xf32>
    %147 = arith.mulf %144, %146 : vector<1x100xf32>
    %148 = arith.addf %142, %147 : vector<1x100xf32>
    %c0_98 = arith.constant 0 : index
    %c3_99 = arith.constant 3 : index
    %c0_100 = arith.constant 0 : index
    %c0_101 = arith.constant 0 : index
    %149 = vector.load %arg5[%c0_98, %c3_99, %c0_100, %c0_101] : memref<1x5x1x100xf32, #tpu.memory_space<vmem>>, vector<1x1x1x100xf32>
    %150 = vector.shape_cast %149 : vector<1x1x1x100xf32> to vector<1x100xf32>
    %c18 = arith.constant 18 : index
    %151 = memref.load %arg3[%c18] : memref<25xf32, #tpu.memory_space<smem>>
    %152 = vector.broadcast %151 : f32 to vector<1x100xf32>
    %153 = arith.mulf %150, %152 : vector<1x100xf32>
    %154 = arith.addf %148, %153 : vector<1x100xf32>
    %c0_102 = arith.constant 0 : index
    %c4_103 = arith.constant 4 : index
    %c0_104 = arith.constant 0 : index
    %c0_105 = arith.constant 0 : index
    %155 = vector.load %arg5[%c0_102, %c4_103, %c0_104, %c0_105] : memref<1x5x1x100xf32, #tpu.memory_space<vmem>>, vector<1x1x1x100xf32>
    %156 = vector.shape_cast %155 : vector<1x1x1x100xf32> to vector<1x100xf32>
    %c19 = arith.constant 19 : index
    %157 = memref.load %arg3[%c19] : memref<25xf32, #tpu.memory_space<smem>>
    %158 = vector.broadcast %157 : f32 to vector<1x100xf32>
    %159 = arith.mulf %156, %158 : vector<1x100xf32>
    %160 = arith.addf %154, %159 : vector<1x100xf32>
    %c3_106 = arith.constant 3 : index
    %161 = memref.load %arg4[%c3_106] : memref<5xf32, #tpu.memory_space<smem>>
    %162 = vector.broadcast %161 : f32 to vector<1x100xf32>
    %163 = arith.addf %160, %162 : vector<1x100xf32>
    %cst_107 = arith.constant 3.000000e+00 : f32
    %164 = vector.broadcast %cst_107 : f32 to vector<1x100xf32>
    %165 = arith.addf %163, %164 : vector<1x100xf32>
    %cst_108 = arith.constant 0.000000e+00 : f32
    %166 = vector.broadcast %cst_108 : f32 to vector<1x100xf32>
    %167 = arith.maximumf %165, %166 : vector<1x100xf32>
    %cst_109 = arith.constant 6.000000e+00 : f32
    %168 = vector.broadcast %cst_109 : f32 to vector<1x100xf32>
    %169 = arith.minimumf %167, %168 : vector<1x100xf32>
    %170 = arith.mulf %163, %169 : vector<1x100xf32>
    %cst_110 = arith.constant 0.166666672 : f32
    %171 = vector.broadcast %cst_110 : f32 to vector<1x100xf32>
    %172 = arith.mulf %170, %171 : vector<1x100xf32>
    %c0_111 = arith.constant 0 : index
    %c3_112 = arith.constant 3 : index
    %c0_113 = arith.constant 0 : index
    %c0_114 = arith.constant 0 : index
    %173 = vector.load %arg6[%c0_111, %c3_112, %c0_113, %c0_114] : memref<1x5x1x100xf32, #tpu.memory_space<vmem>>, vector<1x1x1x100xf32>
    %174 = vector.shape_cast %173 : vector<1x1x1x100xf32> to vector<1x100xf32>
    %175 = vector.shape_cast %172 : vector<1x100xf32> to vector<1x1x1x100xf32>
    tpu.vector_store %arg6[%c0_111, %c3_112, %c0_113, %c0_114], %175 {strides = array<i32>} : memref<1x5x1x100xf32, #tpu.memory_space<vmem>>, vector<1x1x1x100xf32>,
    %c0_115 = arith.constant 0 : index
    %c0_116 = arith.constant 0 : index
    %c0_117 = arith.constant 0 : index
    %c0_118 = arith.constant 0 : index
    %176 = vector.load %arg5[%c0_115, %c0_116, %c0_117, %c0_118] : memref<1x5x1x100xf32, #tpu.memory_space<vmem>>, vector<1x1x1x100xf32>
    %177 = vector.shape_cast %176 : vector<1x1x1x100xf32> to vector<1x100xf32>
    %c20 = arith.constant 20 : index
    %178 = memref.load %arg3[%c20] : memref<25xf32, #tpu.memory_space<smem>>
    %179 = vector.broadcast %178 : f32 to vector<1x100xf32>
    %180 = arith.mulf %177, %179 : vector<1x100xf32>
    %c0_119 = arith.constant 0 : index
    %c1_120 = arith.constant 1 : index
    %c0_121 = arith.constant 0 : index
    %c0_122 = arith.constant 0 : index
    %181 = vector.load %arg5[%c0_119, %c1_120, %c0_121, %c0_122] : memref<1x5x1x100xf32, #tpu.memory_space<vmem>>, vector<1x1x1x100xf32>
    %182 = vector.shape_cast %181 : vector<1x1x1x100xf32> to vector<1x100xf32>
    %c21 = arith.constant 21 : index
    %183 = memref.load %arg3[%c21] : memref<25xf32, #tpu.memory_space<smem>>
    %184 = vector.broadcast %183 : f32 to vector<1x100xf32>
    %185 = arith.mulf %182, %184 : vector<1x100xf32>
    %186 = arith.addf %180, %185 : vector<1x100xf32>
    %c0_123 = arith.constant 0 : index
    %c2_124 = arith.constant 2 : index
    %c0_125 = arith.constant 0 : index
    %c0_126 = arith.constant 0 : index
    %187 = vector.load %arg5[%c0_123, %c2_124, %c0_125, %c0_126] : memref<1x5x1x100xf32, #tpu.memory_space<vmem>>, vector<1x1x1x100xf32>
    %188 = vector.shape_cast %187 : vector<1x1x1x100xf32> to vector<1x100xf32>
    %c22 = arith.constant 22 : index
    %189 = memref.load %arg3[%c22] : memref<25xf32, #tpu.memory_space<smem>>
    %190 = vector.broadcast %189 : f32 to vector<1x100xf32>
    %191 = arith.mulf %188, %190 : vector<1x100xf32>
    %192 = arith.addf %186, %191 : vector<1x100xf32>
    %c0_127 = arith.constant 0 : index
    %c3_128 = arith.constant 3 : index
    %c0_129 = arith.constant 0 : index
    %c0_130 = arith.constant 0 : index
    %193 = vector.load %arg5[%c0_127, %c3_128, %c0_129, %c0_130] : memref<1x5x1x100xf32, #tpu.memory_space<vmem>>, vector<1x1x1x100xf32>
    %194 = vector.shape_cast %193 : vector<1x1x1x100xf32> to vector<1x100xf32>
    %c23 = arith.constant 23 : index
    %195 = memref.load %arg3[%c23] : memref<25xf32, #tpu.memory_space<smem>>
    %196 = vector.broadcast %195 : f32 to vector<1x100xf32>
    %197 = arith.mulf %194, %196 : vector<1x100xf32>
    %198 = arith.addf %192, %197 : vector<1x100xf32>
    %c0_131 = arith.constant 0 : index
    %c4_132 = arith.constant 4 : index
    %c0_133 = arith.constant 0 : index
    %c0_134 = arith.constant 0 : index
    %199 = vector.load %arg5[%c0_131, %c4_132, %c0_133, %c0_134] : memref<1x5x1x100xf32, #tpu.memory_space<vmem>>, vector<1x1x1x100xf32>
    %200 = vector.shape_cast %199 : vector<1x1x1x100xf32> to vector<1x100xf32>
    %c24 = arith.constant 24 : index
    %201 = memref.load %arg3[%c24] : memref<25xf32, #tpu.memory_space<smem>>
    %202 = vector.broadcast %201 : f32 to vector<1x100xf32>
    %203 = arith.mulf %200, %202 : vector<1x100xf32>
    %204 = arith.addf %198, %203 : vector<1x100xf32>
    %c4_135 = arith.constant 4 : index
    %205 = memref.load %arg4[%c4_135] : memref<5xf32, #tpu.memory_space<smem>>
    %206 = vector.broadcast %205 : f32 to vector<1x100xf32>
    %207 = arith.addf %204, %206 : vector<1x100xf32>
    %cst_136 = arith.constant 3.000000e+00 : f32
    %208 = vector.broadcast %cst_136 : f32 to vector<1x100xf32>
    %209 = arith.addf %207, %208 : vector<1x100xf32>
    %cst_137 = arith.constant 0.000000e+00 : f32
    %210 = vector.broadcast %cst_137 : f32 to vector<1x100xf32>
    %211 = arith.maximumf %209, %210 : vector<1x100xf32>
    %cst_138 = arith.constant 6.000000e+00 : f32
    %212 = vector.broadcast %cst_138 : f32 to vector<1x100xf32>
    %213 = arith.minimumf %211, %212 : vector<1x100xf32>
    %214 = arith.mulf %207, %213 : vector<1x100xf32>
    %cst_139 = arith.constant 0.166666672 : f32
    %215 = vector.broadcast %cst_139 : f32 to vector<1x100xf32>
    %216 = arith.mulf %214, %215 : vector<1x100xf32>
    %c0_140 = arith.constant 0 : index
    %c4_141 = arith.constant 4 : index
    %c0_142 = arith.constant 0 : index
    %c0_143 = arith.constant 0 : index
    %217 = vector.load %arg6[%c0_140, %c4_141, %c0_142, %c0_143] : memref<1x5x1x100xf32, #tpu.memory_space<vmem>>, vector<1x1x1x100xf32>
    %218 = vector.shape_cast %217 : vector<1x1x1x100xf32> to vector<1x100xf32>
    %219 = vector.shape_cast %216 : vector<1x100xf32> to vector<1x1x1x100xf32>
    tpu.vector_store %arg6[%c0_140, %c4_141, %c0_142, %c0_143], %219 {strides = array<i32>} : memref<1x5x1x100xf32, #tpu.memory_space<vmem>>, vector<1x1x1x100xf32>,
    return
  }
  func.func @transform_0(%arg0: i32, %arg1: i32, %arg2: i32) -> i32 {
    %c0_i32 = arith.constant 0 : i32
    %c0_i32_0 = arith.constant 0 : i32
    return %c0_i32 : i32
  }
  func.func @transform_1(%arg0: i32, %arg1: i32, %arg2: i32) -> i32 {
    %c0_i32 = arith.constant 0 : i32
    %c0_i32_0 = arith.constant 0 : i32
    return %c0_i32 : i32
  }
  func.func @transform_2(%arg0: i32, %arg1: i32, %arg2: i32) -> (i32, i32, i32, i32) {
    %c0_i32 = arith.constant 0 : i32
    %c0_i32_0 = arith.constant 0 : i32
    return %arg0, %c0_i32, %arg1, %arg2 : i32, i32, i32, i32
  }
  func.func @transform_3(%arg0: i32, %arg1: i32, %arg2: i32) -> (i32, i32, i32, i32) {
    %c0_i32 = arith.constant 0 : i32
    %c0_i32_0 = arith.constant 0 : i32
    return %arg0, %c0_i32, %arg1, %arg2 : i32, i32, i32, i32
  }
}

</mosaic_0001>

<llo_original>
// kernel: tpu_custom_call.1
$region0: #{tpu_custom_call.1}
  #allocation0 [shape = 'u32[]', space=smem, size = 0x4, offset = 0x4, fixed_abs, tag = 'smem constant byte address 0x4 - core index']
  #allocation1 [shape = 'u32[144,128]{1,0:T(1,128)}', space=vmem, size = 0x12000, scoped, tag = 'internal scratch']
  %s0 = inlined_call_operand.hbm [shape: f32[25], index: 0, kind: input, shape index: {}]
  %s1 = inlined_call_operand.vmem [shape: f32[5], index: 1, kind: input, shape index: {}]
  %s2 = inlined_call_operand.vmem [shape: f32[1,5,1,100], index: 2, kind: input, shape index: {}]
  %s3 = inlined_call_operand.hbm [shape: f32[1,5,1,100], index: 3, kind: output, shape index: {}]
  %s4 = sld [smem:[#allocation0]]
  $region30: #{tpu_custom_call.1} parent=0
    _
  %s6 = ssub.s32 1, %s4
  %s7 = scalar_select 0, %s6, %s4
  $region1: #{tpu_custom_call.1} parent=0
    #allocation2 [shape = 'u8[512]{0}', space=smem, size = 0x200, scoped, tag = 'input window, operand 0, single buffered']
    #allocation3 [shape = 's32[1]{0}', space=sflag, size = 0x4, scoped, tag = 'scoped memory for tpu_custom_call.1']
    #allocation4 [shape = 's32[1]{0}', space=sflag, size = 0x4, scoped, tag = 'scoped memory for tpu_custom_call.1']
    #allocation5 [shape = 's32[1]{0}', space=sflag, size = 0x4, scoped, tag = 'scoped memory for tpu_custom_call.1']
    #allocation6 [shape = 'u8[512]{0}', space=smem, size = 0x200, scoped, tag = 'input window, operand 1, single buffered']
    #allocation7 [shape = 'u8[2560]{0}', space=vmem, size = 0xc00, scoped, tag = 'output window, operand 0, single buffered']
    %8 = vsyncpa [#allocation4], 0
    %9 = vsyncpa [#allocation5], 0
    %10 = vsyncpa [#allocation3], 0
    // Predicated region
    $region2: #{tpu_custom_call.1} parent=1 // pred_check
      _
    $region3: #{tpu_custom_call.1} parent=1 // pred_check_branch
      %12 = sbr.rel (0) target = $region5
    $region4: #{tpu_custom_call.1} parent=1 // pred_region
      %s14 = ssub.s32 16, 16
      %15 = vsyncadd [#allocation4], %s14
      %18 = dma.hbm_to_smem %s0, 16, [#allocation2], [#allocation4]
    $region5: #{tpu_custom_call.1} parent=1 // pred_fallthru
      _
    // Predicated region
    $region6: #{tpu_custom_call.1} parent=1 // pred_check
      _
    $region7: #{tpu_custom_call.1} parent=1 // pred_check_branch
      %20 = sbr.rel (0) target = $region9
    $region8: #{tpu_custom_call.1} parent=1 // pred_region
      %s22 = ssub.s32 16, 16
      %23 = vsyncadd [#allocation5], %s22
      %s25 = sshll.u32 %s1, 4
      %s26 = int_to_ptr.vmem [resolvable:$true] %s25
      %28 = dma.vmem_to_smem %s26, 16, [#allocation6], [#allocation5]
    $region9: #{tpu_custom_call.1} parent=1 // pred_fallthru
      _
    // Predicated region
    $region10: #{tpu_custom_call.1} parent=1 // pred_check
      _
    $region11: #{tpu_custom_call.1} parent=1 // pred_check_branch
      %30 = sbr.rel (0) target = $region13
    $region12: #{tpu_custom_call.1} parent=1 // pred_region
      _
    $region13: #{tpu_custom_call.1} parent=1 // pred_fallthru
      _
    // Predicated region
    $region14: #{tpu_custom_call.1} parent=1 // pred_check
      _
    $region15: #{tpu_custom_call.1} parent=1 // pred_check_branch
      %32 = sbr.rel (0) target = $region17
    $region16: #{tpu_custom_call.1} parent=1 // pred_region
      %33 = dma.done [#allocation4], 16
    $region17: #{tpu_custom_call.1} parent=1 // pred_fallthru
      _
    // Predicated region
    $region18: #{tpu_custom_call.1} parent=1 // pred_check
      _
    $region19: #{tpu_custom_call.1} parent=1 // pred_check_branch
      %35 = sbr.rel (0) target = $region21
    $region20: #{tpu_custom_call.1} parent=1 // pred_region
      %36 = dma.done [#allocation5], 16
    $region21: #{tpu_custom_call.1} parent=1 // pred_fallthru
      _
    %37 = sfence
    %v38 = vld [vmem:[%s2] sm:$0x1]
    %s39 = sld [smem:[#allocation2]]
    %v40 = vstv %s39
    %v41 = vmul.f32 %v38, %v40
    %s42 = scalar_lea.vmem %s2, 1
    %v43 = vld [vmem:[%s42] sm:$0x1]
    %s44 = sld [smem:[#allocation2 + $0x1]]
    %v45 = vstv %s44
    %v46 = vmul.f32 %v43, %v45
    %v47 = vadd.f32 %v41, %v46
    %s48 = scalar_lea.vmem %s2, 2
    %v49 = vld [vmem:[%s48] sm:$0x1]
    %s50 = sld [smem:[#allocation2 + $0x2]]
    %v51 = vstv %s50
    %v52 = vmul.f32 %v49, %v51
    %v53 = vadd.f32 %v47, %v52
    %s54 = scalar_lea.vmem %s2, 3
    %v55 = vld [vmem:[%s54] sm:$0x1]
    %s56 = sld [smem:[#allocation2 + $0x3]]
    %v57 = vstv %s56
    %v58 = vmul.f32 %v55, %v57
    %v59 = vadd.f32 %v53, %v58
    %s60 = scalar_lea.vmem %s2, 4
    %v61 = vld [vmem:[%s60] sm:$0x1]
    %s62 = sld [smem:[#allocation2 + $0x4]]
    %v63 = vstv %s62
    %v64 = vmul.f32 %v61, %v63
    %v65 = vadd.f32 %v59, %v64
    %s66 = sld [smem:[#allocation6]]
    %v67 = vstv %s66
    %v68 = vadd.f32 %v65, %v67
    %v69 = vadd.f32 %v68, 3.0
    %v70 = vmax.f32 %v69, 0.0
    %v71 = vmin.f32 %v70, 6.0
    %v72 = vmul.f32 %v68, %v71
    %v73 = vmul.f32 %v72, 0.16666667
    %vm74 = vcmask 811008
    %75 = vst.msk [vmem:[#allocation7] sm:$0x1] %vm74, %v73
    %v76 = vld [vmem:[%s2] sm:$0x1]
    %s77 = sld [smem:[#allocation2 + $0x5]]
    %v78 = vstv %s77
    %v79 = vmul.f32 %v76, %v78
    %v80 = vld [vmem:[%s42] sm:$0x1]
    %s81 = sld [smem:[#allocation2 + $0x6]]
    %v82 = vstv %s81
    %v83 = vmul.f32 %v80, %v82
    %v84 = vadd.f32 %v79, %v83
    %v85 = vld [vmem:[%s48] sm:$0x1]
    %s86 = sld [smem:[#allocation2 + $0x7]]
    %v87 = vstv %s86
    %v88 = vmul.f32 %v85, %v87
    %v89 = vadd.f32 %v84, %v88
    %v90 = vld [vmem:[%s54] sm:$0x1]
    %s91 = sld [smem:[#allocation2 + $0x8]]
    %v92 = vstv %s91
    %v93 = vmul.f32 %v90, %v92
    %v94 = vadd.f32 %v89, %v93
    %v95 = vld [vmem:[%s60] sm:$0x1]
    %s96 = sld [smem:[#allocation2 + $0x9]]
    %v97 = vstv %s96
    %v98 = vmul.f32 %v95, %v97
    %v99 = vadd.f32 %v94, %v98
    %s100 = sld [smem:[#allocation6 + $0x1]]
    %v101 = vstv %s100
    %v102 = vadd.f32 %v99, %v101
    %v103 = vadd.f32 %v102, 3.0
    %v104 = vmax.f32 %v103, 0.0
    %v105 = vmin.f32 %v104, 6.0
    %v106 = vmul.f32 %v102, %v105
    %v107 = vmul.f32 %v106, 0.16666667
    %s108 = scalar_lea.vmem [#allocation7], 1
    %109 = vst.msk [vmem:[%s108] sm:$0x1] %vm74, %v107
    %v110 = vld [vmem:[%s2] sm:$0x1]
    %s111 = sld [smem:[#allocation2 + $0xa]]
    %v112 = vstv %s111
    %v113 = vmul.f32 %v110, %v112
    %v114 = vld [vmem:[%s42] sm:$0x1]
    %s115 = sld [smem:[#allocation2 + $0xb]]
    %v116 = vstv %s115
    %v117 = vmul.f32 %v114, %v116
    %v118 = vadd.f32 %v113, %v117
    %v119 = vld [vmem:[%s48] sm:$0x1]
    %s120 = sld [smem:[#allocation2 + $0xc]]
    %v121 = vstv %s120
    %v122 = vmul.f32 %v119, %v121
    %v123 = vadd.f32 %v118, %v122
    %v124 = vld [vmem:[%s54] sm:$0x1]
    %s125 = sld [smem:[#allocation2 + $0xd]]
    %v126 = vstv %s125
    %v127 = vmul.f32 %v124, %v126
    %v128 = vadd.f32 %v123, %v127
    %v129 = vld [vmem:[%s60] sm:$0x1]
    %s130 = sld [smem:[#allocation2 + $0xe]]
    %v131 = vstv %s130
    %v132 = vmul.f32 %v129, %v131
    %v133 = vadd.f32 %v128, %v132
    %s134 = sld [smem:[#allocation6 + $0x2]]
    %v135 = vstv %s134
    %v136 = vadd.f32 %v133, %v135
    %v137 = vadd.f32 %v136, 3.0
    %v138 = vmax.f32 %v137, 0.0
    %v139 = vmin.f32 %v138, 6.0
    %v140 = vmul.f32 %v136, %v139
    %v141 = vmul.f32 %v140, 0.16666667
    %s142 = scalar_lea.vmem [#allocation7], 2
    %143 = vst.msk [vmem:[%s142] sm:$0x1] %vm74, %v141
    %v144 = vld [vmem:[%s2] sm:$0x1]
    %s145 = sld [smem:[#allocation2 + $0xf]]
    %v146 = vstv %s145
    %v147 = vmul.f32 %v144, %v146
    %v148 = vld [vmem:[%s42] sm:$0x1]
    %s149 = sld [smem:[#allocation2 + $0x10]]
    %v150 = vstv %s149
    %v151 = vmul.f32 %v148, %v150
    %v152 = vadd.f32 %v147, %v151
    %v153 = vld [vmem:[%s48] sm:$0x1]
    %s154 = sld [smem:[#allocation2 + $0x11]]
    %v155 = vstv %s154
    %v156 = vmul.f32 %v153, %v155
    %v157 = vadd.f32 %v152, %v156
    %v158 = vld [vmem:[%s54] sm:$0x1]
    %s159 = sld [smem:[#allocation2 + $0x12]]
    %v160 = vstv %s159
    %v161 = vmul.f32 %v158, %v160
    %v162 = vadd.f32 %v157, %v161
    %v163 = vld [vmem:[%s60] sm:$0x1]
    %s164 = sld [smem:[#allocation2 + $0x13]]
    %v165 = vstv %s164
    %v166 = vmul.f32 %v163, %v165
    %v167 = vadd.f32 %v162, %v166
    %s168 = sld [smem:[#allocation6 + $0x3]]
    %v169 = vstv %s168
    %v170 = vadd.f32 %v167, %v169
    %v171 = vadd.f32 %v170, 3.0
    %v172 = vmax.f32 %v171, 0.0
    %v173 = vmin.f32 %v172, 6.0
    %v174 = vmul.f32 %v170, %v173
    %v175 = vmul.f32 %v174, 0.16666667
    %s176 = scalar_lea.vmem [#allocation7], 3
    %177 = vst.msk [vmem:[%s176] sm:$0x1] %vm74, %v175
    %v178 = vld [vmem:[%s2] sm:$0x1]
    %s179 = sld [smem:[#allocation2 + $0x14]]
    %v180 = vstv %s179
    %v181 = vmul.f32 %v178, %v180
    %v182 = vld [vmem:[%s42] sm:$0x1]
    %s183 = sld [smem:[#allocation2 + $0x15]]
    %v184 = vstv %s183
    %v185 = vmul.f32 %v182, %v184
    %v186 = vadd.f32 %v181, %v185
    %v187 = vld [vmem:[%s48] sm:$0x1]
    %s188 = sld [smem:[#allocation2 + $0x16]]
    %v189 = vstv %s188
    %v190 = vmul.f32 %v187, %v189
    %v191 = vadd.f32 %v186, %v190
    %v192 = vld [vmem:[%s54] sm:$0x1]
    %s193 = sld [smem:[#allocation2 + $0x17]]
    %v194 = vstv %s193
    %v195 = vmul.f32 %v192, %v194
    %v196 = vadd.f32 %v191, %v195
    %v197 = vld [vmem:[%s60] sm:$0x1]
    %s198 = sld [smem:[#allocation2 + $0x18]]
    %v199 = vstv %s198
    %v200 = vmul.f32 %v197, %v199
    %v201 = vadd.f32 %v196, %v200
    %s202 = sld [smem:[#allocation6 + $0x4]]
    %v203 = vstv %s202
    %v204 = vadd.f32 %v201, %v203
    %v205 = vadd.f32 %v204, 3.0
    %v206 = vmax.f32 %v205, 0.0
    %v207 = vmin.f32 %v206, 6.0
    %v208 = vmul.f32 %v204, %v207
    %v209 = vmul.f32 %v208, 0.16666667
    %s210 = scalar_lea.vmem [#allocation7], 4
    %211 = vst.msk [vmem:[%s210] sm:$0x1] %vm74, %v209
    // Predicated region
    $region22: #{tpu_custom_call.1} parent=1 // pred_check
      _
    $region23: #{tpu_custom_call.1} parent=1 // pred_check_branch
      %213 = sbr.rel (0) target = $region25
    $region24: #{tpu_custom_call.1} parent=1 // pred_region
      %s215 = ssub.s32 80, 80
      %216 = vsyncadd [#allocation3], %s215
      %s217 = sshll.u32 [#allocation7], 4
      %s218 = int_to_ptr.vmem [resolvable:$true] %s217
      %223 = dma.vmem_to_hbm [thread:$0]  %s218, 80, %s3, [#allocation3], 16, 16, 1
    $region25: #{tpu_custom_call.1} parent=1 // pred_fallthru
      _
    // Predicated region
    $region26: #{tpu_custom_call.1} parent=1 // pred_check
      _
    $region27: #{tpu_custom_call.1} parent=1 // pred_check_branch
      %225 = sbr.rel (0) target = $region29
    $region28: #{tpu_custom_call.1} parent=1 // pred_region
      %226 = dma.done [#allocation3], 80
    $region29: #{tpu_custom_call.1} parent=1 // pred_fallthru
      _
    %227 = vsyncpa [#allocation3], 1
    %228 = vsyncpa [#allocation4], 1
    %229 = vsyncpa [#allocation5], 1

</llo_original>
